<compile_context>
chip_gen: v7x
topology: tpu7x:2x2x1
jax: 0.10.0
libtpu: 0.0.40
codegen_flags: <defaults>
</compile_context>

<pallas_src>
import functools

import jax
import jax.numpy as jnp
from jax import lax
from jax.experimental import pallas as pl
from jax.experimental.pallas import tpu as pltpu

BN_EPS = 1e-5


def mlp_kernel(x_ref, w0t_ref, w1t_ref, pack_ref, out_ref):
    """Fused eval-mode forward for one batch tile, feature-major (batch on lanes)."""
    h0 = w0t_ref.shape[0]
    h1 = w1t_ref.shape[0]

    # Packed f32 params, one column each: [b0 | b1_folded | wo_folded | bo_folded].
    b0 = pack_ref[0:h0, 0:1]      # (h0, 1)
    b1 = pack_ref[0:h1, 1:2]      # (h1, 1)
    wo = pack_ref[0:h1, 2:3]      # (h1, 1)
    bo = pack_ref[0:1, 3:4]       # (1, 1)

    # bf16 MXU operands (no-op if x already arrives bf16); accumulate in f32.
    xb = x_ref[...].astype(w0t_ref.dtype)                          # (tb, F)

    # h[h, b] = sum_f W0^T[h, f] * x[b, f]  (A @ B^T on the MXU, batch -> lanes).
    h = lax.dot_general(w0t_ref[...], xb, (((1,), (1,)), ((), ())),
                        preferred_element_type=jnp.float32) + b0   # (h0, tb)
    h = jnp.maximum(h, 0.0)

    h = jnp.dot(w1t_ref[...], h.astype(w1t_ref.dtype),
                preferred_element_type=jnp.float32) + b1           # (h1, tb)
    h = jnp.maximum(h, 0.0)

    # Output layer has a single unit: VPU multiply + XLU sublane reduce instead of a
    # 1-useful-column MXU matmul (avoids the serialized MRF pop on v5e/v6e).
    logits = jnp.sum(h * wo, axis=0, keepdims=True) + bo           # (1, tb) lane-dense
    out_ref[...] = jax.nn.sigmoid(logits).astype(out_ref.dtype)


@functools.partial(jax.jit, static_argnames=("block_b",))
def custom_dynamic_net_forward(x, folded, block_b=2048):
    """folded = (w0T_bf16 (h0,F), w1T_bf16_folded (h1,h0), pack_f32 (Hmax,4))."""
    w0t, w1t, pack = folded
    batch, in_features = x.shape
    h0, h1 = w0t.shape[0], w1t.shape[0]

    if batch <= block_b:
        # Single grid step: whole batch is one tile (block == full array dims).
        tb = batch
        grid = (1,)
    else:
        # Multi-tile: tb must be a multiple of (8, 128) constraints on x/out blocks.
        tb = max(128, (block_b // 128) * 128)
        grid = (pl.cdiv(batch, tb),)   # ragged tail handled by Pallas masking (no pad)

    flops = 2 * batch * (in_features * h0 + h0 * h1 + h1)
    bytes_accessed = (batch * in_features * x.dtype.itemsize      # x read
                      + batch * 4                                 # out write
                      + w0t.size * w0t.dtype.itemsize
                      + w1t.size * w1t.dtype.itemsize
                      + pack.size * 4)

    out = pl.pallas_call(
        mlp_kernel,
        out_shape=jax.ShapeDtypeStruct((1, batch), jnp.float32),
        grid=grid,
        in_specs=[
            pl.BlockSpec((tb, in_features), lambda i: (i, 0)),    # activations: tiled
            pl.BlockSpec((h0, in_features), lambda i: (0, 0)),    # weights: VMEM-resident
            pl.BlockSpec((h1, h0), lambda i: (0, 0)),
            pl.BlockSpec(pack.shape, lambda i: (0, 0)),           # one packed param DMA
        ],
        out_specs=pl.BlockSpec((1, tb), lambda i: (0, i)),        # lane-dense output row
        compiler_params=pltpu.CompilerParams(
            dimension_semantics=("parallel",),        # v7x: shard batch tiles across 2 TCs
            vmem_limit_bytes=32 * 1024 * 1024,
        ),
        cost_estimate=pl.CostEstimate(flops=flops, transcendentals=batch,
                                      bytes_accessed=bytes_accessed),
    )(x, w0t, w1t, pack)
    return out.reshape(batch, 1)


# ----------------------------- parameter setup -----------------------------

def _linear_init(key, fan_in, fan_out):
    """PyTorch nn.Linear default init (uniform +/- 1/sqrt(fan_in)); W stored (in, out)."""
    kw, kb = jax.random.split(key)
    bound = 1.0 / jnp.sqrt(jnp.float32(fan_in))
    w = jax.random.uniform(kw, (fan_in, fan_out), jnp.float32, -bound, bound)
    b = jax.random.uniform(kb, (1, fan_out), jnp.float32, -bound, bound)
    return w, b


def make_params(key, input_size, hidden_nodes):
    """Deterministic raw parameters matching CustomDynamicNet.__init__ shapes."""
    assert len(hidden_nodes) == 2, "this fused kernel is written for num_layers=2"
    keys = jax.random.split(key, 8)

    w0, b0 = _linear_init(keys[0], input_size, hidden_nodes[0])
    w1, b1 = _linear_init(keys[1], hidden_nodes[0], hidden_nodes[1])
    wo, bo = _linear_init(keys[2], hidden_nodes[1], 1)

    def bn(key, n):
        kg, kb, km, kv = jax.random.split(key, 4)
        gamma = 1.0 + 0.1 * jax.random.normal(kg, (1, n), jnp.float32)
        beta = 0.1 * jax.random.normal(kb, (1, n), jnp.float32)
        rmean = 0.05 * jax.random.normal(km, (1, n), jnp.float32)
        rvar = 1.0 + 0.1 * jax.random.uniform(kv, (1, n), jnp.float32)
        return gamma, beta, rmean, rvar

    g0, be0, m0, v0 = bn(keys[3], hidden_nodes[0])
    g1, be1, m1, v1 = bn(keys[4], hidden_nodes[1])

    return (w0, b0, g0, be0, m0, v0,
            w1, b1, g1, be1, m1, v1,
            wo, bo)


def fold_bn_into_linear(params, param_dtype=jnp.bfloat16):
    """Fold eval-mode BatchNorm1d into the following Linear; transpose for the
    feature-major kernel; pack all small vectors into one (Hmax, 4) f32 array.
    Run ONCE, in f32."""
    (w0, b0, g0, be0, m0, v0,
     w1, b1, g1, be1, m1, v1,
     wo, bo) = [p.astype(jnp.float32) for p in params]

    scale0 = g0 * lax.rsqrt(v0 + BN_EPS)              # (1, h0)
    shift0 = be0 - scale0 * m0
    scale1 = g1 * lax.rsqrt(v1 + BN_EPS)              # (1, h1)
    shift1 = be1 - scale1 * m1

    w1f = scale0.reshape(-1, 1) * w1                  # row-scale (h0, h1)
    b1f = b1 + shift0 @ w1                            # (1, h1)
    wof = scale1.reshape(-1, 1) * wo                  # (h1, 1)
    bof = bo + shift1 @ wo                            # (1, 1)

    h0n, h1n = w0.shape[1], w1.shape[1]
    hmax = max(h0n, h1n)
    pack = jnp.zeros((hmax, 4), jnp.float32)
    pack = pack.at[:h0n, 0].set(b0[0])                # b0
    pack = pack.at[:h1n, 1].set(b1f[0])               # b1 (folded)
    pack = pack.at[:h1n, 2].set(wof[:, 0])            # output-layer weight column (folded)
    pack = pack.at[0, 3].set(bof[0, 0])               # output-layer bias (folded)

    return (w0.T.astype(param_dtype),                 # (h0, F)
            w1f.T.astype(param_dtype),                # (h1, h0)
            pack)


# ------------------------------- references --------------------------------

def reference_forward(x, params):
    """Pure-JAX f32 reference of the original eval-mode forward (unfolded BN)."""
    (w0, b0, g0, be0, m0, v0,
     w1, b1, g1, be1, m1, v1,
     wo, bo) = params
    h = jnp.maximum(x @ w0 + b0, 0.0)
    h = g0 * (h - m0) / jnp.sqrt(v0 + BN_EPS) + be0
    h = jnp.maximum(h @ w1 + b1, 0.0)
    h = g1 * (h - m1) / jnp.sqrt(v1 + BN_EPS) + be1
    return jax.nn.sigmoid(h @ wo + bo)


def reference_forward_folded(x, folded):
    """Pure-JAX mirror of the folded feature-major bf16 kernel math (tight check)."""
    w0t, w1t, pack = folded
    h0n, h1n = w0t.shape[0], w1t.shape[0]
    b0 = pack[0:h0n, 0:1]
    b1 = pack[0:h1n, 1:2]
    wo = pack[0:h1n, 2:3]
    bo = pack[0:1, 3:4]
    xb = x.astype(w0t.dtype)
    h = lax.dot_general(w0t, xb, (((1,), (1,)), ((), ())),
                        preferred_element_type=jnp.float32) + b0
    h = jnp.maximum(h, 0.0)
    h = jnp.dot(w1t, h.astype(w1t.dtype), preferred_element_type=jnp.float32) + b1
    h = jnp.maximum(h, 0.0)
    logits = jnp.sum(h * wo, axis=0, keepdims=True) + bo
    return jax.nn.sigmoid(logits).reshape(-1, 1)


if __name__ == "__main__":
    key = jax.random.PRNGKey(0)
    k_x, k_p, k_x2 = jax.random.split(key, 3)

    input_size = 16
    hidden_nodes = [32, 32]   # num_layers = 2

    raw_params = make_params(k_p, input_size, hidden_nodes)
    folded = fold_bn_into_linear(raw_params)   # once, in f32, outside the per-call jit

    # Case 1: small batch -> single grid step (grid=(1,)), lane-dense (1, batch) output.
    batch = 64
    x = jax.random.normal(k_x, (batch, input_size), jnp.float32)
    out = jax.block_until_ready(custom_dynamic_net_forward(x, folded))
    assert out.shape == (batch, 1), out.shape
    assert jnp.allclose(out, reference_forward_folded(x, folded),
                        atol=5e-4, rtol=1e-3), "mismatch vs folded bf16 reference (case 1)"
    assert jnp.allclose(out, reference_forward(x, raw_params),
                        atol=1e-2), "mismatch vs f32 eval-mode reference (case 1)"

    # Case 2: ragged multi-tile batch -> grid=cdiv(300,128)=3, masked tail, no wrapper pad.
    batch2 = 300
    x2 = jax.random.normal(k_x2, (batch2, input_size), jnp.float32)
    out2 = jax.block_until_ready(custom_dynamic_net_forward(x2, folded, block_b=128))
    assert out2.shape == (batch2, 1), out2.shape
    assert jnp.allclose(out2, reference_forward_folded(x2, folded),
                        atol=5e-4, rtol=1e-3), "mismatch vs folded bf16 reference (case 2)"
    assert jnp.allclose(out2, reference_forward(x2, raw_params),
                        atol=1e-2), "mismatch vs f32 eval-mode reference (case 2)"

    print("KERNEL_OK")
</pallas_src>

<mosaic_0001>
module attributes {stable_mosaic.version = 11 : i64} {
  func.func @mlp_kernel(%arg0: i32, %arg1: memref<64x16xf32, #tpu.memory_space<vmem>>, %arg2: memref<32x16xbf16, #tpu.memory_space<vmem>>, %arg3: memref<32x32xbf16, #tpu.memory_space<vmem>>, %arg4: memref<32x4xf32, #tpu.memory_space<vmem>>, %arg5: memref<1x64xf32, #tpu.memory_space<vmem>>) attributes {dimension_semantics = [#tpu.dimension_semantics<parallel>], iteration_bounds = array<i64: 1>, scalar_prefetch = 0 : i64, scratch_operands = 0 : i64, tpu.core_type = #tpu.core_type<tc>, window_params = [{transform_indices = @transform_0, window_bounds = array<i64: 64, 16>}, {pipeline_mode = #tpu.pipeline_mode<synchronous>, transform_indices = @transform_1, window_bounds = array<i64: 32, 16>}, {pipeline_mode = #tpu.pipeline_mode<synchronous>, transform_indices = @transform_2, window_bounds = array<i64: 32, 32>}, {pipeline_mode = #tpu.pipeline_mode<synchronous>, transform_indices = @transform_3, window_bounds = array<i64: 32, 4>}, {transform_indices = @transform_4, window_bounds = array<i64: 1, 64>}]} {
    %c0 = arith.constant 0 : index
    %c0_0 = arith.constant 0 : index
    %0 = vector.load %arg4[%c0, %c0_0] : memref<32x4xf32, #tpu.memory_space<vmem>>, vector<32x1xf32>
    %c0_1 = arith.constant 0 : index
    %c1 = arith.constant 1 : index
    %1 = vector.load %arg4[%c0_1, %c1] : memref<32x4xf32, #tpu.memory_space<vmem>>, vector<32x1xf32>
    %c0_2 = arith.constant 0 : index
    %c2 = arith.constant 2 : index
    %2 = vector.load %arg4[%c0_2, %c2] : memref<32x4xf32, #tpu.memory_space<vmem>>, vector<32x1xf32>
    %c0_3 = arith.constant 0 : index
    %c3 = arith.constant 3 : index
    %3 = vector.load %arg4[%c0_3, %c3] : memref<32x4xf32, #tpu.memory_space<vmem>>, vector<1x1xf32>
    %c0_4 = arith.constant 0 : index
    %c0_5 = arith.constant 0 : index
    %4 = vector.load %arg1[%c0_4, %c0_5] : memref<64x16xf32, #tpu.memory_space<vmem>>, vector<64x16xf32>
    %5 = arith.truncf %4 : vector<64x16xf32> to vector<64x16xbf16>
    %c0_6 = arith.constant 0 : index
    %c0_7 = arith.constant 0 : index
    %6 = vector.load %arg2[%c0_6, %c0_7] : memref<32x16xbf16, #tpu.memory_space<vmem>>, vector<32x16xbf16>
    %cst = arith.constant dense<0.000000e+00> : vector<32x64xf32>
    %7 = tpu.matmul %6, %5, %cst {dimension_numbers = #tpu.dot_dimension_numbers<[1], [1], [0], [0], [0, 0, 1, 0], [], []>} : vector<32x16xbf16>, vector<64x16xbf16>, vector<32x64xf32> -> vector<32x64xf32>
    %8 = vector.broadcast %0 : vector<32x1xf32> to vector<32x64xf32>
    %9 = arith.addf %7, %8 : vector<32x64xf32>
    %cst_8 = arith.constant 0.000000e+00 : f32
    %10 = vector.broadcast %cst_8 : f32 to vector<32x64xf32>
    %11 = arith.maximumf %9, %10 : vector<32x64xf32>
    %c0_9 = arith.constant 0 : index
    %c0_10 = arith.constant 0 : index
    %12 = vector.load %arg3[%c0_9, %c0_10] : memref<32x32xbf16, #tpu.memory_space<vmem>>, vector<32x32xbf16>
    %13 = arith.truncf %11 : vector<32x64xf32> to vector<32x64xbf16>
    %cst_11 = arith.constant dense<0.000000e+00> : vector<32x64xf32>
    %14 = tpu.matmul %12, %13, %cst_11 {dimension_numbers = #tpu.dot_dimension_numbers<[1], [0], [0], [1], [0, 0, 1, 1], [], []>} : vector<32x32xbf16>, vector<32x64xbf16>, vector<32x64xf32> -> vector<32x64xf32>
    %15 = vector.broadcast %1 : vector<32x1xf32> to vector<32x64xf32>
    %16 = arith.addf %14, %15 : vector<32x64xf32>
    %cst_12 = arith.constant 0.000000e+00 : f32
    %17 = vector.broadcast %cst_12 : f32 to vector<32x64xf32>
    %18 = arith.maximumf %16, %17 : vector<32x64xf32>
    %19 = vector.broadcast %2 : vector<32x1xf32> to vector<32x64xf32>
    %20 = arith.mulf %18, %19 : vector<32x64xf32>
    %cst_13 = arith.constant dense<0.000000e+00> : vector<64xf32>
    %21 = vector.multi_reduction <add>, %20, %cst_13 [0] : vector<32x64xf32> to vector<64xf32>
    %22 = vector.shape_cast %21 : vector<64xf32> to vector<1x64xf32>
    %23 = vector.broadcast %3 : vector<1x1xf32> to vector<1x64xf32>
    %24 = arith.addf %22, %23 : vector<1x64xf32>
    %25 = arith.negf %24 : vector<1x64xf32>
    %26 = math.exp %25 : vector<1x64xf32>
    %cst_14 = arith.constant 1.000000e+00 : f32
    %27 = vector.broadcast %cst_14 : f32 to vector<1x64xf32>
    %28 = arith.addf %27, %26 : vector<1x64xf32>
    %29 = arith.divf %27, %28 : vector<1x64xf32>
    %c0_15 = arith.constant 0 : index
    %c0_16 = arith.constant 0 : index
    %30 = vector.load %arg5[%c0_15, %c0_16] : memref<1x64xf32, #tpu.memory_space<vmem>>, vector<1x64xf32>
    tpu.vector_store %arg5[%c0_15, %c0_16], %29 {strides = array<i32>} : memref<1x64xf32, #tpu.memory_space<vmem>>, vector<1x64xf32>,
    return
  }
  func.func @transform_0(%arg0: i32) -> (i32, i32) {
    %c0_i32 = arith.constant 0 : i32
    %c0_i32_0 = arith.constant 0 : i32
    return %arg0, %c0_i32 : i32, i32
  }
  func.func @transform_1(%arg0: i32) -> (i32, i32) {
    %c0_i32 = arith.constant 0 : i32
    %c0_i32_0 = arith.constant 0 : i32
    %c0_i32_1 = arith.constant 0 : i32
    return %c0_i32, %c0_i32_0 : i32, i32
  }
  func.func @transform_2(%arg0: i32) -> (i32, i32) {
    %c0_i32 = arith.constant 0 : i32
    %c0_i32_0 = arith.constant 0 : i32
    %c0_i32_1 = arith.constant 0 : i32
    return %c0_i32, %c0_i32_0 : i32, i32
  }
  func.func @transform_3(%arg0: i32) -> (i32, i32) {
    %c0_i32 = arith.constant 0 : i32
    %c0_i32_0 = arith.constant 0 : i32
    %c0_i32_1 = arith.constant 0 : i32
    return %c0_i32, %c0_i32_0 : i32, i32
  }
  func.func @transform_4(%arg0: i32) -> (i32, i32) {
    %c0_i32 = arith.constant 0 : i32
    %c0_i32_0 = arith.constant 0 : i32
    return %c0_i32, %arg0 : i32, i32
  }
}

</mosaic_0001>

<llo_original>
// kernel: custom_dynamic_net_forward.1
$region0: #{custom_dynamic_net_forward.1}
  #allocation0 [shape = 'u32[]', space=smem, size = 0x4, offset = 0x4, fixed_abs, tag = 'smem constant byte address 0x4 - core index']
  #allocation1 [shape = 'u32[144,128]{1,0:T(1,128)}', space=vmem, size = 0x12000, scoped, tag = 'internal scratch']
  %s0 = inlined_call_operand.vmem [shape: f32[64,16], index: 0, kind: input, shape index: {}]
  %s1 = inlined_call_operand.vmem [shape: bf16[32,16], index: 1, kind: input, shape index: {}]
  %s2 = inlined_call_operand.vmem [shape: bf16[32,32], index: 2, kind: input, shape index: {}]
  %s3 = inlined_call_operand.vmem [shape: f32[32,4], index: 3, kind: input, shape index: {}]
  %s4 = inlined_call_operand.hbm [shape: f32[1,64], index: 4, kind: output, shape index: {}]
  %s5 = sld [smem:[#allocation0]]
  $region26: #{custom_dynamic_net_forward.1} parent=0
    _
  %s7 = ssub.s32 1, %s5
  %s8 = scalar_select 0, %s7, %s5
  $region1: #{custom_dynamic_net_forward.1} parent=0
    #allocation2 [shape = 'u8[512]{0}', space=vmem, size = 0x400, scoped, tag = 'output window, operand 0, single buffered']
    #allocation3 [shape = 's32[1]{0}', space=sflag, size = 0x4, scoped, tag = 'scoped memory for custom_dynamic_net_forward.1']
    %9 = vsyncpa [#allocation3], 0
    // Predicated region
    $region2: #{custom_dynamic_net_forward.1} parent=1 // pred_check
      _
    $region3: #{custom_dynamic_net_forward.1} parent=1 // pred_check_branch
      %11 = sbr.rel (0) target = $region5
    $region4: #{custom_dynamic_net_forward.1} parent=1 // pred_region
      _
    $region5: #{custom_dynamic_net_forward.1} parent=1 // pred_fallthru
      _
    // Predicated region
    $region6: #{custom_dynamic_net_forward.1} parent=1 // pred_check
      _
    $region7: #{custom_dynamic_net_forward.1} parent=1 // pred_check_branch
      %13 = sbr.rel (0) target = $region9
    $region8: #{custom_dynamic_net_forward.1} parent=1 // pred_region
      _
    $region9: #{custom_dynamic_net_forward.1} parent=1 // pred_fallthru
      _
    // Predicated region
    $region10: #{custom_dynamic_net_forward.1} parent=1 // pred_check
      _
    $region11: #{custom_dynamic_net_forward.1} parent=1 // pred_check_branch
      %15 = sbr.rel (0) target = $region13
    $region12: #{custom_dynamic_net_forward.1} parent=1 // pred_region
      _
    $region13: #{custom_dynamic_net_forward.1} parent=1 // pred_fallthru
      _
    // Predicated region
    $region14: #{custom_dynamic_net_forward.1} parent=1 // pred_check
      _
    $region15: #{custom_dynamic_net_forward.1} parent=1 // pred_check_branch
      %17 = sbr.rel (0) target = $region17
    $region16: #{custom_dynamic_net_forward.1} parent=1 // pred_region
      _
    $region17: #{custom_dynamic_net_forward.1} parent=1 // pred_fallthru
      _
    %v19 = vld [vmem:[%s3] sm:$0xff]
    %v20 = vld [vmem:[%s3 + $0x8] sm:$0xff]
    %v21 = vld [vmem:[%s3 + $0x10] sm:$0xff]
    %v22 = vld [vmem:[%s3 + $0x18] sm:$0xff]
    %v23 = vld [vmem:[%s3] sm:$0x1]
    %v24 = vld [vmem:[%s0] sm:$0xff]
    %v25 = vld [vmem:[%s0 + $0x8] sm:$0xff]
    %v26 = vld [vmem:[%s0 + $0x10] sm:$0xff]
    %v27 = vld [vmem:[%s0 + $0x18] sm:$0xff]
    %v28 = vld [vmem:[%s0 + $0x20] sm:$0xff]
    %v29 = vld [vmem:[%s0 + $0x28] sm:$0xff]
    %v30 = vld [vmem:[%s0 + $0x30] sm:$0xff]
    %v31 = vld [vmem:[%s0 + $0x38] sm:$0xff]
    %v32 = vpack.c.bf16 %v25, %v24
    %v33 = vpack.c.bf16 %v27, %v26
    %v34 = vpack.c.bf16 %v29, %v28
    %v35 = vpack.c.bf16 %v31, %v30
    %v36 = vld [vmem:[%s1] sm:$0xf]
    %v37 = vld [vmem:[%s1 + $0x4] sm:$0xf]
    %v38 = vld [vmem:[%s1 + $0x8] sm:$0xf]
    %v39 = vld [vmem:[%s1 + $0xc] sm:$0xf]
    %41 = vset.pattern.permute.xlu0 0
    %42 = vperm.xlu0 %41, %v19
    %v43 = vpop.permute.xlu0 %42
    %46 = vset.pattern.permute.xlu0 0
    %47 = vperm.xlu0 %46, %v20
    %v48 = vpop.permute.xlu0 %47
    %51 = vset.pattern.permute.xlu0 0
    %52 = vperm.xlu0 %51, %v21
    %v53 = vpop.permute.xlu0 %52
    %56 = vset.pattern.permute.xlu0 0
    %57 = vperm.xlu0 %56, %v22
    %v58 = vpop.permute.xlu0 %57
    %v64 = vunpack.c.l.b16 %v36
    %v65 = vunpack.c.l.b16 %v37
    %v66 = vunpack.c.l.b16 %v38
    %v67 = vunpack.c.l.b16 %v39
    %v68 = vpack.c.b16 %v65, %v64
    %v69 = vpack.c.b16 %v67, %v66
    %vm70 = vcmask 130048
    %v72 = vsel %vm70, %v68, 0
    %v75 = vsel %vm70, %v69, 0
    %v78 = vsel %vm70, %v32, 0
    %v81 = vsel %vm70, %v33, 0
    %v84 = vsel %vm70, %v34, 0
    %v87 = vsel %vm70, %v35, 0
    %89 = vmatprep.subr.bf16.mxu0 0
    %90 = vmatpush1.bf16.xpose.msra.mxu0 %v78
    %91 = vmatprep.subr.bf16.mxu0 0
    %92 = vmatpush1.bf16.xpose.msra.mxu0 %v81
    %93 = vmatprep.subr.bf16.mxu0 0
    %94 = vmatpush1.bf16.xpose.msra.mxu0 %v84
    %95 = vmatprep.subr.bf16.mxu0 0
    %96 = vmatpush1.bf16.xpose.msra.mxu0 %v87
    %97 = vmatprep.subr.bf16.mxu0 0
    %98 = vmatpush1.bf16.xpose.msra.mxu0 0
    %99 = vmatprep.subr.bf16.mxu0 0
    %100 = vmatpush1.bf16.xpose.msra.mxu0 0
    %101 = vmatprep.subr.bf16.mxu0 0
    %102 = vmatpush1.bf16.xpose.msra.mxu0 0
    %103 = vmatprep.subr.bf16.mxu0 0
    %104 = vmatpush1.bf16.xpose.msra.mxu0 0
    %105 = vmatprep.subr.bf16.mxu0 0
    %106 = vmatpush1.bf16.xpose.msra.mxu0 0
    %107 = vmatprep.subr.bf16.mxu0 0
    %108 = vmatpush1.bf16.xpose.msra.mxu0 0
    %109 = vmatprep.subr.bf16.mxu0 0
    %110 = vmatpush1.bf16.xpose.msra.mxu0 0
    %111 = vmatprep.subr.bf16.mxu0 0
    %112 = vmatpush1.bf16.xpose.msra.mxu0 0
    %113 = vmatprep.subr.bf16.mxu0 0
    %114 = vmatpush1.bf16.xpose.msra.mxu0 0
    %115 = vmatprep.subr.bf16.mxu0 0
    %116 = vmatpush1.bf16.xpose.msra.mxu0 0
    %117 = vmatprep.subr.bf16.mxu0 0
    %118 = vmatpush1.bf16.xpose.msra.mxu0 0
    %119 = vmatprep.subr.bf16.mxu0 0
    %120 = vmatpush1.bf16.xpose.msra.mxu0 0
    %121 = vmatprep.mubr.bf16.mxu0 0
    %122 = vmatmul.mubr.bf16.gmra.mrb[0].mxu0 %v72
    %v123 = vpop.f32.mrb[0].mxu0
    %v124 = vadd.f32 %v43, %v123
    %v125 = vpop.f32.mrb[0].mxu0
    %v126 = vpop.f32.mrb[0].mxu0
    %v127 = vadd.f32 %v48, %v126
    %v128 = vpop.f32.mrb[0].mxu0
    %129 = vmatprep.mubr.bf16.mxu0 0
    %130 = vmatmul.mubr.bf16.gmra.mrb[0].mxu0 %v75
    %v131 = vpop.f32.mrb[0].mxu0
    %v132 = vadd.f32 %v53, %v131
    %v133 = vpop.f32.mrb[0].mxu0
    %v134 = vpop.f32.mrb[0].mxu0
    %v135 = vadd.f32 %v58, %v134
    %v136 = vpop.f32.mrb[0].mxu0
    %137 = vdwg.mxu0
    %v138 = vmax.f32 %v124, 0.0
    %v139 = vmax.f32 %v127, 0.0
    %v140 = vmax.f32 %v132, 0.0
    %v141 = vmax.f32 %v135, 0.0
    %v142 = vld [vmem:[%s2] sm:$0xf]
    %v143 = vld [vmem:[%s2 + $0x4] sm:$0xf]
    %v144 = vld [vmem:[%s2 + $0x8] sm:$0xf]
    %v145 = vld [vmem:[%s2 + $0xc] sm:$0xf]
    %v146 = vpack.c.bf16 %v139, %v138
    %v147 = vpack.c.bf16 %v141, %v140
    %148 = vset.pattern.permute.xlu0 1
    %149 = vperm.xlu0 %148, %v19
    %v150 = vpop.permute.xlu0 %149
    %152 = vset.pattern.permute.xlu0 1
    %153 = vperm.xlu0 %152, %v20
    %v154 = vpop.permute.xlu0 %153
    %156 = vset.pattern.permute.xlu0 1
    %157 = vperm.xlu0 %156, %v21
    %v158 = vpop.permute.xlu0 %157
    %160 = vset.pattern.permute.xlu0 1
    %161 = vperm.xlu0 %160, %v22
    %v162 = vpop.permute.xlu0 %161
    %v168 = vunpack.c.l.b16 %v142
    %v169 = vunpack.c.l.b16 %v143
    %v170 = vunpack.c.l.b16 %v144
    %v171 = vunpack.c.l.b16 %v145
    %v172 = vpack.c.b16 %v169, %v168
    %v173 = vpack.c.b16 %v171, %v170
    %vm174 = vcmask 261120
    %v176 = vsel %vm174, %v172, 0
    %v179 = vsel %vm174, %v173, 0
    %181 = vmatprep.subr.bf16.mxu0 0
    %182 = vmatpush1.bf16.msra.mxu0 %v146
    %183 = vmatprep.subr.bf16.mxu0 0
    %184 = vmatpush1.bf16.msra.mxu0 %v147
    %185 = vmatprep.subr.bf16.mxu0 0
    %186 = vmatpush1.bf16.msra.mxu0 0
    %187 = vmatprep.subr.bf16.mxu0 0
    %188 = vmatpush1.bf16.msra.mxu0 0
    %189 = vmatprep.subr.bf16.mxu0 0
    %190 = vmatpush1.bf16.msra.mxu0 0
    %191 = vmatprep.subr.bf16.mxu0 0
    %192 = vmatpush1.bf16.msra.mxu0 0
    %193 = vmatprep.subr.bf16.mxu0 0
    %194 = vmatpush1.bf16.msra.mxu0 0
    %195 = vmatprep.subr.bf16.mxu0 0
    %196 = vmatpush1.bf16.msra.mxu0 0
    %197 = vmatprep.subr.bf16.mxu0 0
    %198 = vmatpush1.bf16.msra.mxu0 0
    %199 = vmatprep.subr.bf16.mxu0 0
    %200 = vmatpush1.bf16.msra.mxu0 0
    %201 = vmatprep.subr.bf16.mxu0 0
    %202 = vmatpush1.bf16.msra.mxu0 0
    %203 = vmatprep.subr.bf16.mxu0 0
    %204 = vmatpush1.bf16.msra.mxu0 0
    %205 = vmatprep.subr.bf16.mxu0 0
    %206 = vmatpush1.bf16.msra.mxu0 0
    %207 = vmatprep.subr.bf16.mxu0 0
    %208 = vmatpush1.bf16.msra.mxu0 0
    %209 = vmatprep.subr.bf16.mxu0 0
    %210 = vmatpush1.bf16.msra.mxu0 0
    %211 = vmatprep.subr.bf16.mxu0 0
    %212 = vmatpush1.bf16.msra.mxu0 0
    %213 = vmatprep.mubr.bf16.mxu0 0
    %214 = vmatmul.mubr.bf16.gmra.mrb[0].mxu0 %v176
    %v215 = vpop.f32.mrb[0].mxu0
    %v216 = vadd.f32 %v150, %v215
    %v217 = vpop.f32.mrb[0].mxu0
    %v218 = vpop.f32.mrb[0].mxu0
    %v219 = vadd.f32 %v154, %v218
    %v220 = vpop.f32.mrb[0].mxu0
    %221 = vmatprep.mubr.bf16.mxu0 0
    %222 = vmatmul.mubr.bf16.gmra.mrb[0].mxu0 %v179
    %v223 = vpop.f32.mrb[0].mxu0
    %v224 = vadd.f32 %v158, %v223
    %v225 = vpop.f32.mrb[0].mxu0
    %v226 = vpop.f32.mrb[0].mxu0
    %v227 = vadd.f32 %v162, %v226
    %v228 = vpop.f32.mrb[0].mxu0
    %229 = vdwg.mxu0
    %v230 = vmax.f32 %v216, 0.0
    %v231 = vmax.f32 %v219, 0.0
    %v232 = vmax.f32 %v224, 0.0
    %v233 = vmax.f32 %v227, 0.0
    %234 = vset.pattern.permute.xlu0 2
    %235 = vperm.xlu0 %234, %v19
    %v236 = vpop.permute.xlu0 %235
    %238 = vset.pattern.permute.xlu0 2
    %239 = vperm.xlu0 %238, %v20
    %v240 = vpop.permute.xlu0 %239
    %242 = vset.pattern.permute.xlu0 2
    %243 = vperm.xlu0 %242, %v21
    %v244 = vpop.permute.xlu0 %243
    %246 = vset.pattern.permute.xlu0 2
    %247 = vperm.xlu0 %246, %v22
    %v248 = vpop.permute.xlu0 %247
    %v250 = vmul.f32 %v230, %v236
    %v251 = vmul.f32 %v231, %v240
    %v252 = vmul.f32 %v232, %v244
    %v253 = vmul.f32 %v233, %v248
    %vm254 = vcmask 523264
    %v255 = vsel %vm254, %v250, 0.0
    %v256 = vsel %vm254, %v251, 0.0
    %v257 = vadd.f32 %v255, %v256
    %v258 = vsel %vm254, %v252, 0.0
    %v259 = vadd.f32 %v257, %v258
    %v260 = vsel %vm254, %v253, 0.0
    %v261 = vadd.f32 %v259, %v260
    %v262 = vrot.slane %v261, 4
    %v263 = vadd.f32 %v261, %v262
    %v264 = vrot.slane %v263, 2
    %v265 = vadd.f32 %v263, %v264
    %v266 = vrot.slane %v265, 1
    %v267 = vadd.f32 %v265, %v266
    %269 = vset.pattern.permute.xlu0 3
    %270 = vperm.xlu0 %269, %v23
    %v271 = vpop.permute.xlu0 %270
    %v273 = vadd.f32 %v267, %v271
    %v274 = vxor.u32 %v273, 2147483648
    %v275 = vmul.f32 %v274, 1.442695
    %v276 = vpow.pop %v275
    %v277 = vadd.f32 %v276, 1.0
    %v278 = vrcp.pop %v277
    %v279 = vmul.f32 1.0, %v278
    %vm280 = vcmask 516096
    %281 = vst.msk [vmem:[#allocation2] sm:$0x1] %vm280, %v279
    // Predicated region
    $region18: #{custom_dynamic_net_forward.1} parent=1 // pred_check
      _
    $region19: #{custom_dynamic_net_forward.1} parent=1 // pred_check_branch
      %283 = sbr.rel (0) target = $region21
    $region20: #{custom_dynamic_net_forward.1} parent=1 // pred_region
      %s285 = ssub.s32 16, 16
      %286 = vsyncadd [#allocation3], %s285
      %s288 = sshll.u32 [#allocation2], 4
      %s289 = int_to_ptr.vmem [resolvable:$true] %s288
      %291 = dma.vmem_to_hbm [thread:$0]  %s289, 16, %s4, [#allocation3]
    $region21: #{custom_dynamic_net_forward.1} parent=1 // pred_fallthru
      _
    // Predicated region
    $region22: #{custom_dynamic_net_forward.1} parent=1 // pred_check
      _
    $region23: #{custom_dynamic_net_forward.1} parent=1 // pred_check_branch
      %293 = sbr.rel (0) target = $region25
    $region24: #{custom_dynamic_net_forward.1} parent=1 // pred_region
      %294 = dma.done [#allocation3], 16
    $region25: #{custom_dynamic_net_forward.1} parent=1 // pred_fallthru
      _
    %295 = vsyncpa [#allocation3], 1

</llo_original>
